<compile_context>
chip_gen: v6e
topology: v6e:2x2x1
jax: 0.10.0
libtpu: 0.0.40
codegen_flags: <defaults>
</compile_context>

<pallas_src>
from functools import reduce
from operator import mul

import jax
import jax.numpy as jnp
from jax.experimental import pallas as pl
from jax.experimental.pallas import tpu as pltpu


_LANES = 128
# ~2 MiB per tile: big enough to amortize per-step overhead (~85%+ of HBM
# roofline per measured tiled-copy data), small enough that double-buffered
# input + output (2 arrays x 2 buffers x tile) stays far below v7x's 32 MiB
# default scoped VMEM (and 64 MiB physical VMEM).
_TARGET_TILE_BYTES = 2 * 1024 * 1024


def _copy_kernel(x_ref, o_ref):
    # Identity copy of one (block_rows, 128) lane-dense tile.
    o_ref[...] = x_ref[...]


def _sublane_align(dtype):
    # Sub-32-bit dtypes pack along sublanes: keep the row count a multiple of
    # the packed sublane count so loads/stores stay unmasked.
    itemsize = jnp.dtype(dtype).itemsize
    return 8 * max(1, 4 // itemsize)  # 8 for f32/i32, 16 for bf16, 32 for i8/fp8


def _pallas_identity_copy_2d(x2d):
    """Identity-copy a (rows, 128) array through a tiled Pallas kernel."""
    rows, lanes = x2d.shape
    itemsize = jnp.dtype(x2d.dtype).itemsize
    align = _sublane_align(x2d.dtype)

    max_rows = _TARGET_TILE_BYTES // (lanes * itemsize)
    max_rows = max(align, (max_rows // align) * align)

    if rows <= max_rows:
        # Whole array is one block (full-extent block shapes are always legal).
        block_rows = rows
        grid = (1,)
    else:
        # Tile-aligned block; ragged last block is masked by Pallas (no pad).
        block_rows = max_rows
        grid = (pl.cdiv(rows, block_rows),)

    return pl.pallas_call(
        _copy_kernel,
        out_shape=jax.ShapeDtypeStruct((rows, lanes), x2d.dtype),
        grid_spec=pltpu.PrefetchScalarGridSpec(
            num_scalar_prefetch=0,
            grid=grid,
            in_specs=[pl.BlockSpec((block_rows, lanes), lambda i: (i, 0))],
            out_specs=pl.BlockSpec((block_rows, lanes), lambda i: (i, 0)),
        ),
        compiler_params=pltpu.CompilerParams(
            # On v7x (2 TCs/chip) a parallel axis lets both cores share the
            # copy; no-op on v5e/v6e.
            dimension_semantics=("parallel",),
        ),
    )(x2d)


class Reshape:
    """JAX/Pallas equivalent of the PyTorch Reshape module (x.view(-1, *shape))."""

    # TODO(synk): true .view semantics share storage; an XLA reshape (pure
    # metadata) would move zero bytes.  The Pallas copy below is kept as the
    # explicit hot path per the exercise, tiled to run at HBM roofline.

    def __init__(self, shape):
        self.shape = tuple(shape)

    def __call__(self, x):
        total = x.size
        tail = reduce(mul, self.shape, 1)
        assert total % tail == 0, "input size not divisible by target shape"
        lead = total // tail

        flat = x.reshape(-1)  # row-major flatten (metadata glue)

        n_main = (total // _LANES) * _LANES
        if n_main == 0:
            # Fewer than 128 elements: no lane-dense tile possible; metadata only.
            copied = flat
        else:
            main = _pallas_identity_copy_2d(
                flat[:n_main].reshape(n_main // _LANES, _LANES)
            ).reshape(-1)
            if n_main != total:
                # Sub-128-element tail: identity, pass it through untouched
                # (avoids any pad/slice extra HBM passes).
                copied = jnp.concatenate([main, flat[n_main:]])
            else:
                copied = main

        return copied.reshape((lead, *self.shape))  # row-major reshape (glue)


if __name__ == "__main__":
    key = jax.random.PRNGKey(0)
    # Input consistent with an NCHW conv activation: (batch=2, C=4, H=16, W=16)
    x = jax.random.normal(key, (2, 4, 16, 16), dtype=jnp.float32)

    # Target shape: reshape each example's 4*16*16 = 1024 elements to (8, 128)
    mod = Reshape((8, 128))
    y = mod(x)
    y = jax.block_until_ready(y)

    # Verify against the pure-JAX reference (== torch .view semantics, row-major).
    y_ref = x.reshape((-1, 8, 128))
    assert y.shape == (2, 8, 128), y.shape
    assert jnp.array_equal(y, y_ref), "Pallas reshape mismatch"

    print("KERNEL_OK")
</pallas_src>

<mosaic_0001>
module attributes {stable_mosaic.version = 11 : i64} {
  func.func @_copy_kernel(%arg0: i32, %arg1: memref<16x128xf32, #tpu.memory_space<vmem>>, %arg2: memref<16x128xf32, #tpu.memory_space<vmem>>) attributes {dimension_semantics = [#tpu.dimension_semantics<parallel>], iteration_bounds = array<i64: 1>, scalar_prefetch = 0 : i64, scratch_operands = 0 : i64, tpu.core_type = #tpu.core_type<tc>, window_params = [{transform_indices = @transform_0, window_bounds = array<i64: 16, 128>}, {transform_indices = @transform_1, window_bounds = array<i64: 16, 128>}]} {
    %c0 = arith.constant 0 : index
    %c0_0 = arith.constant 0 : index
    %0 = vector.load %arg1[%c0, %c0_0] : memref<16x128xf32, #tpu.memory_space<vmem>>, vector<16x128xf32>
    %c0_1 = arith.constant 0 : index
    %c0_2 = arith.constant 0 : index
    %1 = vector.load %arg2[%c0_1, %c0_2] : memref<16x128xf32, #tpu.memory_space<vmem>>, vector<16x128xf32>
    tpu.vector_store %arg2[%c0_1, %c0_2], %0 {strides = array<i32>} : memref<16x128xf32, #tpu.memory_space<vmem>>, vector<16x128xf32>,
    return
  }
  func.func @transform_0(%arg0: i32) -> (i32, i32) {
    %c0_i32 = arith.constant 0 : i32
    %c0_i32_0 = arith.constant 0 : i32
    return %arg0, %c0_i32 : i32, i32
  }
  func.func @transform_1(%arg0: i32) -> (i32, i32) {
    %c0_i32 = arith.constant 0 : i32
    %c0_i32_0 = arith.constant 0 : i32
    return %arg0, %c0_i32 : i32, i32
  }
}

</mosaic_0001>

<llo_original>
// kernel: tpu_custom_call.1
$region0: #{tpu_custom_call.1}
  #allocation0 [shape = 'u32[]', space=smem, size = 0x4, offset = 0x4, fixed_abs, tag = 'smem constant byte address 0x4 - core index']
  #allocation1 [shape = 'u32[144,128]{1,0:T(1,128)}', space=vmem, size = 0x12000, scoped, tag = 'internal scratch']
  %s0 = inlined_call_operand.hbm [shape: f32[16,128], index: 0, kind: input, shape index: {}]
  %s1 = inlined_call_operand.hbm [shape: f32[16,128], index: 1, kind: output, shape index: {}]
  %s2 = sld [smem:[#allocation0]]
  $region18: #{tpu_custom_call.1} parent=0
    _
  %s4 = ssub.s32 1, %s2
  %s5 = scalar_select 0, %s4, %s2
  $region1: #{tpu_custom_call.1} parent=0
    #allocation2 [shape = 'u8[8192]{0}', space=vmem, size = 0x2000, scoped, tag = 'input window, operand 0, single buffered']
    #allocation3 [shape = 's32[1]{0}', space=sflag, size = 0x4, scoped, tag = 'scoped memory for tpu_custom_call.1']
    #allocation4 [shape = 's32[1]{0}', space=sflag, size = 0x4, scoped, tag = 'scoped memory for tpu_custom_call.1']
    #allocation5 [shape = 'u8[8192]{0}', space=vmem, size = 0x2000, scoped, tag = 'output window, operand 0, single buffered']
    %6 = vsyncpa [#allocation3], 0
    %7 = vsyncpa [#allocation4], 0
    // Predicated region
    $region2: #{tpu_custom_call.1} parent=1 // pred_check
      _
    $region3: #{tpu_custom_call.1} parent=1 // pred_check_branch
      %9 = sbr.rel (0) target = $region5
    $region4: #{tpu_custom_call.1} parent=1 // pred_region
      %s11 = ssub.s32 256, 256
      %12 = vsyncadd [#allocation3], %s11
      %s13 = sshll.u32 [#allocation2], 4
      %s14 = int_to_ptr.vmem [resolvable:$true] %s13
      %19 = dma.hbm_to_vmem [thread:$0]  %s0, 256, %s14, [#allocation3], 128, 128, 8
    $region5: #{tpu_custom_call.1} parent=1 // pred_fallthru
      _
    // Predicated region
    $region6: #{tpu_custom_call.1} parent=1 // pred_check
      _
    $region7: #{tpu_custom_call.1} parent=1 // pred_check_branch
      %21 = sbr.rel (0) target = $region9
    $region8: #{tpu_custom_call.1} parent=1 // pred_region
      %22 = dma.done [#allocation3], 256
    $region9: #{tpu_custom_call.1} parent=1 // pred_fallthru
      _
    %v23 = vld [vmem:[#allocation2] sm:$0xff]
    %v24 = vld [vmem:[#allocation2 + $0x8] sm:$0xff]
    %25 = vst [vmem:[#allocation5] sm:$0xff] %v23
    %26 = vst [vmem:[#allocation5 + $0x8] sm:$0xff] %v24
    // Predicated region
    $region10: #{tpu_custom_call.1} parent=1 // pred_check
      _
    $region11: #{tpu_custom_call.1} parent=1 // pred_check_branch
      %28 = sbr.rel (0) target = $region13
    $region12: #{tpu_custom_call.1} parent=1 // pred_region
      %s30 = ssub.s32 256, 256
      %31 = vsyncadd [#allocation4], %s30
      %s32 = sshll.u32 [#allocation5], 4
      %s33 = int_to_ptr.vmem [resolvable:$true] %s32
      %38 = dma.vmem_to_hbm [thread:$0]  %s33, 256, %s1, [#allocation4], 128, 128, 8
    $region13: #{tpu_custom_call.1} parent=1 // pred_fallthru
      _
    // Predicated region
    $region14: #{tpu_custom_call.1} parent=1 // pred_check
      _
    $region15: #{tpu_custom_call.1} parent=1 // pred_check_branch
      %40 = sbr.rel (0) target = $region17
    $region16: #{tpu_custom_call.1} parent=1 // pred_region
      %41 = dma.done [#allocation4], 256
    $region17: #{tpu_custom_call.1} parent=1 // pred_fallthru
      _
    %42 = vsyncpa [#allocation3], 1
    %43 = vsyncpa [#allocation4], 1

</llo_original>
